<compile_context>
chip_gen: v7x
topology: tpu7x:2x2x1
jax: 0.10.0
libtpu: 0.0.40
codegen_flags: <defaults>
</compile_context>

<pallas_src>
import math
from functools import partial

import jax
import jax.numpy as jnp
from jax.experimental import pallas as pl
from jax.experimental.pallas import tpu as pltpu


def _choose_q_tile(seq, max_tq=512):
    """Largest query tile that divides seq; prefer 128-multiples, then 8-multiples."""
    if seq <= max_tq:
        return seq
    for tq in range(max_tq - (max_tq % 128), 0, -128):
        if tq > 0 and seq % tq == 0:
            return tq
    for tq in range(max_tq - (max_tq % 8), 0, -8):
        if tq > 0 and seq % tq == 0:
            return tq
    return seq


def _make_kernel(seq, head_dim, tq, compute_dtype):
    scale = 1.0 / math.sqrt(head_dim)

    def kernel(xq_ref, xf_ref, wq_ref, wk_ref, bq_ref, bk_ref, o_ref, k_scratch):
        # xq_ref: (1, TQ, D)  query-tile rows of x
        # xf_ref: (1, S, D)   full x (only read on the first query tile)
        # wq_ref/wk_ref: (1, D, hd) per-head projection weights
        # bq_ref/bk_ref: (1, 1, hd) per-head biases
        # o_ref:  (1, 1, TQ, S) softmax(QK^T * scale + causal_mask) tile
        # k_scratch: (S, hd)  K for the current (batch, head), persists over q tiles
        qi = pl.program_id(2)

        # Project K for the whole sequence once per (batch, head).
        @pl.when(qi == 0)
        def _():
            xf = xf_ref[0].astype(compute_dtype)                       # (S, D)
            wk = wk_ref[0].astype(compute_dtype)                       # (D, hd)
            k = jnp.dot(xf, wk, preferred_element_type=jnp.float32) + bk_ref[0]
            k_scratch[...] = k.astype(k_scratch.dtype)

        # Q projection for this query tile (f32 accumulation).
        xq = xq_ref[0].astype(compute_dtype)                           # (TQ, D)
        wq = wq_ref[0].astype(compute_dtype)                           # (D, hd)
        q = jnp.dot(xq, wq, preferred_element_type=jnp.float32) + bq_ref[0]

        # scores = q @ k^T via transposed contraction (no explicit .T / XLU pass).
        k = k_scratch[...]                                             # (S, hd)
        sc = jax.lax.dot_general(
            q.astype(compute_dtype), k,
            dimension_numbers=(((1,), (1,)), ((), ())),
            preferred_element_type=jnp.float32) * scale                # (TQ, S)

        # Fused additive causal mask: -10000 on the strict upper triangle.
        row = jax.lax.broadcasted_iota(jnp.int32, (tq, seq), 0) + qi * tq
        col = jax.lax.broadcasted_iota(jnp.int32, (tq, seq), 1)
        sc = jnp.where(col > row, sc - 10000.0, sc)

        # Softmax over keys (all f32).
        m = jnp.max(sc, axis=-1, keepdims=True)
        e = jnp.exp(sc - m)
        denom = jnp.sum(e, axis=-1, keepdims=True)
        o_ref[0, 0] = (e * pl.reciprocal(denom, approx=False)).astype(o_ref.dtype)

    return kernel


def prepare_params(w, b, num_content_vectors, use_bf16=False):
    """Repack torch-Linear (2D, D) weight and (2D,) bias into per-head slices.

    Returns (w_q, w_k, b_q, b_k) with shapes (H, D, hd), (H, D, hd), (H, 1, hd),
    (H, 1, hd). Call once at parameter-load time (not per forward call).
    """
    two_d, d = w.shape
    assert two_d == 2 * d and b.shape == (2 * d,)
    h = num_content_vectors
    hd = d // h
    wt = w.T                                                    # (D, 2D)
    w_q = wt[:, :d].reshape(d, h, hd).transpose(1, 0, 2)        # (H, D, hd)
    w_k = wt[:, d:].reshape(d, h, hd).transpose(1, 0, 2)        # (H, D, hd)
    b_q = b[:d].reshape(h, 1, hd)
    b_k = b[d:].reshape(h, 1, hd)
    if use_bf16:
        w_q = w_q.astype(jnp.bfloat16)
        w_k = w_k.astype(jnp.bfloat16)
    return w_q, w_k, b_q, b_k


@partial(jax.jit, static_argnames=("use_bf16", "max_q_tile"))
def context_self_attn(x, w_q, w_k, b_q, b_k, use_bf16=False, max_q_tile=512):
    """x: (B, S, D) f32; per-head params from prepare_params. Returns (B, H, S, S)."""
    B, S, D = x.shape
    H, _, hd = w_q.shape
    assert H * hd == D

    TQ = _choose_q_tile(S, max_q_tile)
    nQ = S // TQ
    compute_dtype = jnp.bfloat16 if use_bf16 else jnp.float32

    kernel = _make_kernel(S, hd, TQ, compute_dtype)

    # Advisory cost estimate: Q/K projections + QK^T flops, one exp per score.
    flops = 2 * B * S * D * (2 * D + S)
    transcendentals = B * H * S * S
    bytes_accessed = 4 * (B * S * D + 2 * D * D + 2 * D + B * H * S * S)
    cost = pl.CostEstimate(flops=flops, transcendentals=transcendentals,
                           bytes_accessed=bytes_accessed)

    # Per-step VMEM estimate (double-buffered blocks + K scratch); only raise the
    # limit beyond the 32 MiB scoped default when actually needed.
    vmem_est = 2 * 4 * (TQ * D + S * D + 2 * D * hd + 2 * hd + TQ * S) + 4 * S * hd
    cp_kwargs = dict(dimension_semantics=("parallel", "parallel", "arbitrary"))
    if vmem_est > 32 * 1024 * 1024:
        cp_kwargs["vmem_limit_bytes"] = int(min(2 * vmem_est, 96 * 1024 * 1024))

    return pl.pallas_call(
        kernel,
        out_shape=jax.ShapeDtypeStruct((B, H, S, S), x.dtype),
        grid_spec=pltpu.PrefetchScalarGridSpec(
            num_scalar_prefetch=0,
            grid=(B, H, nQ),
            in_specs=[
                pl.BlockSpec((1, TQ, D), lambda b, h, q: (b, q, 0)),   # x (query tile)
                pl.BlockSpec((1, S, D), lambda b, h, q: (b, 0, 0)),    # x (full, for K)
                pl.BlockSpec((1, D, hd), lambda b, h, q: (h, 0, 0)),   # W_q head slice
                pl.BlockSpec((1, D, hd), lambda b, h, q: (h, 0, 0)),   # W_k head slice
                pl.BlockSpec((1, 1, hd), lambda b, h, q: (h, 0, 0)),   # b_q head slice
                pl.BlockSpec((1, 1, hd), lambda b, h, q: (h, 0, 0)),   # b_k head slice
            ],
            out_specs=pl.BlockSpec((1, 1, TQ, S), lambda b, h, q: (b, h, q, 0)),
            scratch_shapes=[pltpu.VMEM((S, hd), compute_dtype)],
        ),
        compiler_params=pltpu.CompilerParams(**cp_kwargs),
        cost_estimate=cost,
    )(x, x, w_q, w_k, b_q, b_k)


def _reference(x, w, b, num_content_vectors):
    """Pure-JAX reproduction of the PyTorch forward, for validation."""
    B, S, D = x.shape
    H = num_content_vectors
    hd = D // H
    proj = jnp.einsum("bsd,od->bso", x, w) + b                  # (B, S, 2D)
    proj = proj.reshape(B, S, 2, H, hd)
    q = proj[:, :, 0]                                           # (B, S, H, hd)
    k = proj[:, :, 1]
    scale = 1.0 / math.sqrt(hd)
    scores = jnp.einsum("bthd,bshd->bhts", q, k * scale)
    mask = jnp.triu(jnp.full((S, S), -10000.0, dtype=scores.dtype), 1)
    scores = scores + mask
    return jax.nn.softmax(scores, axis=-1)


if __name__ == "__main__":
    # Small shapes consistent with the module: batch=2, seq=8, embed=32, heads=4
    B, S, D = 2, 8, 32
    NUM_CONTENT_VECTORS = 4

    key = jax.random.PRNGKey(0)
    kx, kw, kb = jax.random.split(key, 3)
    x = jax.random.normal(kx, (B, S, D), dtype=jnp.float32)
    # Deterministic FusedDense params (torch Linear layout: (out, in))
    w = jax.random.normal(kw, (2 * D, D), dtype=jnp.float32) * (1.0 / math.sqrt(D))
    b = jax.random.normal(kb, (2 * D,), dtype=jnp.float32) * 0.01

    ref = _reference(x, w, b, NUM_CONTENT_VECTORS)

    # f32 MXU-input path: exact module semantics (tight tolerance).
    params_f32 = prepare_params(w, b, NUM_CONTENT_VECTORS, use_bf16=False)
    out = context_self_attn(x, *params_f32, use_bf16=False)
    out = jax.block_until_ready(out)
    assert out.shape == (B, NUM_CONTENT_VECTORS, S, S)
    assert jnp.allclose(out, ref, atol=1e-4, rtol=1e-4), "f32 path mismatch vs reference"

    # bf16 MXU-input path (fast path on v5e/v6e/v7x): f32 accumulation + softmax,
    # so only the matmul operands are rounded — check against a loose tolerance.
    params_bf16 = prepare_params(w, b, NUM_CONTENT_VECTORS, use_bf16=True)
    out_bf16 = context_self_attn(x, *params_bf16, use_bf16=True)
    out_bf16 = jax.block_until_ready(out_bf16)
    assert out_bf16.shape == (B, NUM_CONTENT_VECTORS, S, S)
    assert float(jnp.max(jnp.abs(out_bf16 - ref))) < 0.1, "bf16 path mismatch vs reference"

    print("KERNEL_OK")
</pallas_src>

<mosaic_0001>
module attributes {stable_mosaic.version = 11 : i64} {
  func.func @kernel(%arg0: i32, %arg1: i32, %arg2: i32, %arg3: memref<1x8x32xf32, #tpu.memory_space<vmem>>, %arg4: memref<1x8x32xf32, #tpu.memory_space<vmem>>, %arg5: memref<1x32x8xf32, #tpu.memory_space<vmem>>, %arg6: memref<1x32x8xf32, #tpu.memory_space<vmem>>, %arg7: memref<1x1x8xf32, #tpu.memory_space<vmem>>, %arg8: memref<1x1x8xf32, #tpu.memory_space<vmem>>, %arg9: memref<1x1x8x8xf32, #tpu.memory_space<vmem>>, %arg10: memref<8x8xf32, #tpu.memory_space<vmem>>) attributes {dimension_semantics = [#tpu.dimension_semantics<parallel>, #tpu.dimension_semantics<parallel>, #tpu.dimension_semantics<arbitrary>], iteration_bounds = array<i64: 2, 4, 1>, scalar_prefetch = 0 : i64, scratch_operands = 1 : i64, tpu.core_type = #tpu.core_type<tc>, window_params = [{transform_indices = @transform_0, window_bounds = array<i64: 1, 8, 32>}, {transform_indices = @transform_1, window_bounds = array<i64: 1, 8, 32>}, {transform_indices = @transform_2, window_bounds = array<i64: 1, 32, 8>}, {transform_indices = @transform_3, window_bounds = array<i64: 1, 32, 8>}, {transform_indices = @transform_4, window_bounds = array<i64: 1, 1, 8>}, {transform_indices = @transform_5, window_bounds = array<i64: 1, 1, 8>}, {transform_indices = @transform_6, window_bounds = array<i64: 1, 1, 8, 8>}]} {
    %c0_i32 = arith.constant 0 : i32
    %0 = arith.cmpi eq, %arg2, %c0_i32 : i32
    %1 = arith.extui %0 : i1 to i32
    %c0_i32_0 = arith.constant 0 : i32
    %2 = arith.cmpi ne, %1, %c0_i32_0 : i32
    scf.if %2 {
      %c0_20 = arith.constant 0 : index
      %c0_21 = arith.constant 0 : index
      %c0_22 = arith.constant 0 : index
      %38 = vector.load %arg4[%c0_20, %c0_21, %c0_22] : memref<1x8x32xf32, #tpu.memory_space<vmem>>, vector<1x8x32xf32>
      %39 = vector.shape_cast %38 : vector<1x8x32xf32> to vector<8x32xf32>
      %c0_23 = arith.constant 0 : index
      %c0_24 = arith.constant 0 : index
      %c0_25 = arith.constant 0 : index
      %40 = vector.load %arg6[%c0_23, %c0_24, %c0_25] : memref<1x32x8xf32, #tpu.memory_space<vmem>>, vector<1x32x8xf32>
      %41 = vector.shape_cast %40 : vector<1x32x8xf32> to vector<32x8xf32>
      %cst_26 = arith.constant dense<0.000000e+00> : vector<8x8xf32>
      %42 = tpu.matmul %39, %41, %cst_26 {dimension_numbers = #tpu.dot_dimension_numbers<[1], [0], [0], [1], [0, 0, 1, 1], [], []>} : vector<8x32xf32>, vector<32x8xf32>, vector<8x8xf32> -> vector<8x8xf32>
      %c0_27 = arith.constant 0 : index
      %c0_28 = arith.constant 0 : index
      %c0_29 = arith.constant 0 : index
      %43 = vector.load %arg8[%c0_27, %c0_28, %c0_29] : memref<1x1x8xf32, #tpu.memory_space<vmem>>, vector<1x1x8xf32>
      %44 = vector.shape_cast %43 : vector<1x1x8xf32> to vector<1x8xf32>
      %45 = vector.broadcast %44 : vector<1x8xf32> to vector<8x8xf32>
      %46 = arith.addf %42, %45 : vector<8x8xf32>
      %c0_30 = arith.constant 0 : index
      %c0_31 = arith.constant 0 : index
      %47 = vector.load %arg10[%c0_30, %c0_31] : memref<8x8xf32, #tpu.memory_space<vmem>>, vector<8x8xf32>
      tpu.vector_store %arg10[%c0_30, %c0_31], %46 {strides = array<i32>} : memref<8x8xf32, #tpu.memory_space<vmem>>, vector<8x8xf32>,
    } else {
    }
    %c0 = arith.constant 0 : index
    %c0_1 = arith.constant 0 : index
    %c0_2 = arith.constant 0 : index
    %3 = vector.load %arg3[%c0, %c0_1, %c0_2] : memref<1x8x32xf32, #tpu.memory_space<vmem>>, vector<1x8x32xf32>
    %4 = vector.shape_cast %3 : vector<1x8x32xf32> to vector<8x32xf32>
    %c0_3 = arith.constant 0 : index
    %c0_4 = arith.constant 0 : index
    %c0_5 = arith.constant 0 : index
    %5 = vector.load %arg5[%c0_3, %c0_4, %c0_5] : memref<1x32x8xf32, #tpu.memory_space<vmem>>, vector<1x32x8xf32>
    %6 = vector.shape_cast %5 : vector<1x32x8xf32> to vector<32x8xf32>
    %cst = arith.constant dense<0.000000e+00> : vector<8x8xf32>
    %7 = tpu.matmul %4, %6, %cst {dimension_numbers = #tpu.dot_dimension_numbers<[1], [0], [0], [1], [0, 0, 1, 1], [], []>} : vector<8x32xf32>, vector<32x8xf32>, vector<8x8xf32> -> vector<8x8xf32>
    %c0_6 = arith.constant 0 : index
    %c0_7 = arith.constant 0 : index
    %c0_8 = arith.constant 0 : index
    %8 = vector.load %arg7[%c0_6, %c0_7, %c0_8] : memref<1x1x8xf32, #tpu.memory_space<vmem>>, vector<1x1x8xf32>
    %9 = vector.shape_cast %8 : vector<1x1x8xf32> to vector<1x8xf32>
    %10 = vector.broadcast %9 : vector<1x8xf32> to vector<8x8xf32>
    %11 = arith.addf %7, %10 : vector<8x8xf32>
    %c0_9 = arith.constant 0 : index
    %c0_10 = arith.constant 0 : index
    %12 = vector.load %arg10[%c0_9, %c0_10] : memref<8x8xf32, #tpu.memory_space<vmem>>, vector<8x8xf32>
    %cst_11 = arith.constant dense<0.000000e+00> : vector<8x8xf32>
    %13 = tpu.matmul %11, %12, %cst_11 {dimension_numbers = #tpu.dot_dimension_numbers<[1], [1], [0], [0], [0, 0, 1, 0], [], []>} : vector<8x8xf32>, vector<8x8xf32>, vector<8x8xf32> -> vector<8x8xf32>
    %cst_12 = arith.constant 0.353553385 : f32
    %14 = vector.broadcast %cst_12 : f32 to vector<8x8xf32>
    %15 = arith.mulf %13, %14 : vector<8x8xf32>
    %16 = tpu.iota {dimensions = array<i32: 0>} : vector<8x8xi32>
    %c8_i32 = arith.constant 8 : i32
    %17 = arith.muli %arg2, %c8_i32 : i32
    %18 = vector.broadcast %17 : i32 to vector<8x8xi32>
    %19 = arith.addi %16, %18 : vector<8x8xi32>
    %20 = tpu.iota {dimensions = array<i32: 1>} : vector<8x8xi32>
    %21 = arith.cmpi sgt, %20, %19 : vector<8x8xi32>
    %cst_13 = arith.constant 1.000000e+04 : f32
    %22 = vector.broadcast %cst_13 : f32 to vector<8x8xf32>
    %23 = arith.subf %15, %22 : vector<8x8xf32>
    %24 = arith.select %21, %23, %15 : vector<8x8xi1>, vector<8x8xf32>
    %cst_14 = arith.constant dense<0xFF800000> : vector<8xf32>
    %25 = vector.multi_reduction <maximumf>, %24, %cst_14 [1] : vector<8x8xf32> to vector<8xf32>
    %26 = vector.shape_cast %25 : vector<8xf32> to vector<8x1xf32>
    %27 = vector.broadcast %26 : vector<8x1xf32> to vector<8x8xf32>
    %28 = arith.subf %24, %27 : vector<8x8xf32>
    %29 = math.exp %28 : vector<8x8xf32>
    %cst_15 = arith.constant dense<0.000000e+00> : vector<8xf32>
    %30 = vector.multi_reduction <add>, %29, %cst_15 [1] : vector<8x8xf32> to vector<8xf32>
    %31 = vector.shape_cast %30 : vector<8xf32> to vector<8x1xf32>
    %32 = tpu.reciprocal %31 : vector<8x1xf32> -> vector<8x1xf32>
    %33 = vector.broadcast %32 : vector<8x1xf32> to vector<8x8xf32>
    %34 = arith.mulf %29, %33 : vector<8x8xf32>
    %c0_16 = arith.constant 0 : index
    %c0_17 = arith.constant 0 : index
    %c0_18 = arith.constant 0 : index
    %c0_19 = arith.constant 0 : index
    %35 = vector.load %arg9[%c0_16, %c0_17, %c0_18, %c0_19] : memref<1x1x8x8xf32, #tpu.memory_space<vmem>>, vector<1x1x8x8xf32>
    %36 = vector.shape_cast %35 : vector<1x1x8x8xf32> to vector<8x8xf32>
    %37 = vector.shape_cast %34 : vector<8x8xf32> to vector<1x1x8x8xf32>
    tpu.vector_store %arg9[%c0_16, %c0_17, %c0_18, %c0_19], %37 {strides = array<i32>} : memref<1x1x8x8xf32, #tpu.memory_space<vmem>>, vector<1x1x8x8xf32>,
    return
  }
  func.func @transform_0(%arg0: i32, %arg1: i32, %arg2: i32) -> (i32, i32, i32) {
    %c0_i32 = arith.constant 0 : i32
    %c0_i32_0 = arith.constant 0 : i32
    return %arg0, %arg2, %c0_i32 : i32, i32, i32
  }
  func.func @transform_1(%arg0: i32, %arg1: i32, %arg2: i32) -> (i32, i32, i32) {
    %c0_i32 = arith.constant 0 : i32
    %c0_i32_0 = arith.constant 0 : i32
    %c0_i32_1 = arith.constant 0 : i32
    return %arg0, %c0_i32, %c0_i32_0 : i32, i32, i32
  }
  func.func @transform_2(%arg0: i32, %arg1: i32, %arg2: i32) -> (i32, i32, i32) {
    %c0_i32 = arith.constant 0 : i32
    %c0_i32_0 = arith.constant 0 : i32
    %c0_i32_1 = arith.constant 0 : i32
    return %arg1, %c0_i32, %c0_i32_0 : i32, i32, i32
  }
  func.func @transform_3(%arg0: i32, %arg1: i32, %arg2: i32) -> (i32, i32, i32) {
    %c0_i32 = arith.constant 0 : i32
    %c0_i32_0 = arith.constant 0 : i32
    %c0_i32_1 = arith.constant 0 : i32
    return %arg1, %c0_i32, %c0_i32_0 : i32, i32, i32
  }
  func.func @transform_4(%arg0: i32, %arg1: i32, %arg2: i32) -> (i32, i32, i32) {
    %c0_i32 = arith.constant 0 : i32
    %c0_i32_0 = arith.constant 0 : i32
    %c0_i32_1 = arith.constant 0 : i32
    return %arg1, %c0_i32, %c0_i32_0 : i32, i32, i32
  }
  func.func @transform_5(%arg0: i32, %arg1: i32, %arg2: i32) -> (i32, i32, i32) {
    %c0_i32 = arith.constant 0 : i32
    %c0_i32_0 = arith.constant 0 : i32
    %c0_i32_1 = arith.constant 0 : i32
    return %arg1, %c0_i32, %c0_i32_0 : i32, i32, i32
  }
  func.func @transform_6(%arg0: i32, %arg1: i32, %arg2: i32) -> (i32, i32, i32, i32) {
    %c0_i32 = arith.constant 0 : i32
    %c0_i32_0 = arith.constant 0 : i32
    return %arg0, %arg1, %arg2, %c0_i32 : i32, i32, i32, i32
  }
}

</mosaic_0001>

<llo_original>
// kernel: context_self_attn.1
$region0: #{context_self_attn.1}
  #allocation0 [shape = 'u32[]', space=smem, size = 0x4, offset = 0x4, fixed_abs, tag = 'smem constant byte address 0x4 - core index']
  #allocation1 [shape = 'u32[144,128]{1,0:T(1,128)}', space=vmem, size = 0x12000, scoped, tag = 'internal scratch']
  #allocation2 [shape = 'f32[8,8]{1,0:T(8,128)}', space=vmem, size = 0x1000, scoped, tag = 'scratch operand']
  %s0 = inlined_call_operand.vmem [shape: f32[2,8,32], index: 0, kind: input, shape index: {}, may-alias: {0,1}]
  %s1 = inlined_call_operand.vmem [shape: f32[2,8,32], index: 1, kind: input, shape index: {}, may-alias: {0,1}]
  %s2 = inlined_call_operand.vmem [shape: f32[4,32,8], index: 2, kind: input, shape index: {}]
  %s3 = inlined_call_operand.vmem [shape: f32[4,32,8], index: 3, kind: input, shape index: {}]
  %s4 = inlined_call_operand.vmem [shape: f32[4,1,8], index: 4, kind: input, shape index: {}]
  %s5 = inlined_call_operand.vmem [shape: f32[4,1,8], index: 5, kind: input, shape index: {}]
  %s6 = inlined_call_operand.hbm [shape: f32[2,4,8,8], index: 6, kind: output, shape index: {}]
  %s7 = sld [smem:[#allocation0]]
  $region61: #{context_self_attn.1} parent=0
    _
  %s9 = ssub.s32 1, %s7
  %s10 = scalar_select 0, %s9, %s7
  $region1: #{context_self_attn.1} parent=0
    #allocation3 [shape = 'u8[8192]{0}', space=vmem, size = 0x2000, scoped, tag = 'output window, operand 0']
    #allocation4 [shape = 's32[2]{0}', space=sflag, size = 0x8, scoped, tag = 'scoped memory for context_self_attn.1']
    %11 = vsyncpa [#allocation4], 0
    %s12 = scalar_lea.sflag [#allocation4], 1
    %13 = vsyncpa %s12, 0
    loop: start=0, step=1, limit=10
    $region2: #{context_self_attn.1} parent=1 // loop_pre_header
      _
    $region3: #{context_self_attn.1} parent=1 // loop_header
      %s15 = sphi 0, %s19
      %p16 = scmp.ge.s32.totalorder %s15, 10
      %s22 = sphi 0, %s41
      %s23 = sphi 0, %s37
      %s24 = sphi 0, %s33
      %s25 = sphi 0, %s22
      %s26 = sphi 0, %s23
      %s27 = sphi 0, %s24
      %s28 = sphi 0, %s25
      %s29 = sphi 0, %s26
      %s30 = sphi 0, %s27
      %s46 = sphi 0, %s48
      %s49 = sphi 0, %s46
      %s50 = sphi 0, %s49
      %s66 = sphi 0, %s50
      %s72 = sphi 0, %s74
      %s75 = sphi 0, %s72
      %s76 = sphi 0, %s75
      %s92 = sphi 0, %s76
      %s98 = sphi 0, %s100
      %s101 = sphi 0, %s98
      %s102 = sphi 0, %s101
      %s118 = sphi 0, %s102
      %s124 = sphi 0, %s126
      %s127 = sphi 0, %s124
      %s128 = sphi 0, %s127
      %s144 = sphi 0, %s128
      %s150 = sphi 0, %s152
      %s153 = sphi 0, %s150
      %s154 = sphi 0, %s153
      %s170 = sphi 0, %s154
      %s176 = sphi 0, %s178
      %s179 = sphi 0, %s176
      %s180 = sphi 0, %s179
      %s196 = sphi 0, %s180
      %s206 = sphi 0, %s208
      %s209 = sphi 0, %s206
      %s210 = sphi 0, %s209
      %s226 = sphi 0, %s210
    $region4: #{context_self_attn.1} parent=1 // loop_header_branch
      %18 = sbr.rel (%p16) target = $region8
    $region5: #{context_self_attn.1} parent=1 // loop_body
      %s20 = ssub.s32 %s15, 1
      %s21 = ssub.s32 %s15, 2
      %s31 = sadd.s32 1, %s24
      %p32 = scmp.ge.s32.totalorder %s31, 1
      %s33 = scalar_select %p32, 0, %s31
      %s34 = sadd.s32 1, %s23
      %s35 = scalar_select %p32, %s34, %s23
      %p36 = scmp.ge.s32.totalorder %s35, 4
      %s37 = scalar_select %p36, 0, %s35
      %s38 = sadd.s32 1, %s22
      %s39 = scalar_select %p36, %s38, %s22
      %p40 = scmp.ge.s32.totalorder %s39, 2
      %s41 = scalar_select %p40, 0, %s39
      %s42 = ssub.s32 %s22, %s41
      %s43 = ssub.s32 %s24, %s33
      %s44 = sor.u32 %s42, %s43
      %p45 = scmp.eq.s32.totalorder %s44, 0
      %s47 = sadd.s32 %s46, 1
      %s48 = scalar_select %p45, %s46, %s47
      %p51 = pneg %p45
      %p52 = scmp.eq.s32.totalorder %s15, 7
      %p53 = por %p51, %p52
      %p54 = scmp.ne.s32.totalorder %s46, %s49
      %p55 = scmp.eq.s32.totalorder %s15, 0
      %p56 = por %p54, %p55
      %p57 = scmp.ne.s32.totalorder %s46, %s49
      %p58 = scmp.eq.s32.totalorder %s20, 7
      %p59 = por %p57, %p58
      %p60 = scmp.ne.s32.totalorder %s49, %s50
      %p61 = scmp.eq.s32.totalorder %s20, 0
      %p62 = por %p60, %p61
      %p63 = scmp.ne.s32.totalorder %s49, %s50
      %p64 = scmp.eq.s32.totalorder %s21, 7
      %p65 = por %p63, %p64
      %p67 = scmp.ne.s32.totalorder %s50, %s66
      %p68 = scmp.eq.s32.totalorder %s21, 0
      %p69 = por %p67, %p68
      %s70 = ssub.s32 %s22, %s41
      %p71 = scmp.eq.s32.totalorder %s70, 0
      %s73 = sadd.s32 %s72, 1
      %s74 = scalar_select %p71, %s72, %s73
      %p77 = pneg %p71
      %p78 = scmp.eq.s32.totalorder %s15, 7
      %p79 = por %p77, %p78
      %p80 = scmp.ne.s32.totalorder %s72, %s75
      %p81 = scmp.eq.s32.totalorder %s15, 0
      %p82 = por %p80, %p81
      %p83 = scmp.ne.s32.totalorder %s72, %s75
      %p84 = scmp.eq.s32.totalorder %s20, 7
      %p85 = por %p83, %p84
      %p86 = scmp.ne.s32.totalorder %s75, %s76
      %p87 = scmp.eq.s32.totalorder %s20, 0
      %p88 = por %p86, %p87
      %p89 = scmp.ne.s32.totalorder %s75, %s76
      %p90 = scmp.eq.s32.totalorder %s21, 7
      %p91 = por %p89, %p90
      %p93 = scmp.ne.s32.totalorder %s76, %s92
      %p94 = scmp.eq.s32.totalorder %s21, 0
      %p95 = por %p93, %p94
      %s96 = ssub.s32 %s23, %s37
      %p97 = scmp.eq.s32.totalorder %s96, 0
      %s99 = sadd.s32 %s98, 1
      %s100 = scalar_select %p97, %s98, %s99
      %p103 = pneg %p97
      %p104 = scmp.eq.s32.totalorder %s15, 7
      %p105 = por %p103, %p104
      %p106 = scmp.ne.s32.totalorder %s98, %s101
      %p107 = scmp.eq.s32.totalorder %s15, 0
      %p108 = por %p106, %p107
      %p109 = scmp.ne.s32.totalorder %s98, %s101
      %p110 = scmp.eq.s32.totalorder %s20, 7
      %p111 = por %p109, %p110
      %p112 = scmp.ne.s32.totalorder %s101, %s102
      %p113 = scmp.eq.s32.totalorder %s20, 0
      %p114 = por %p112, %p113
      %p115 = scmp.ne.s32.totalorder %s101, %s102
      %p116 = scmp.eq.s32.totalorder %s21, 7
      %p117 = por %p115, %p116
      %p119 = scmp.ne.s32.totalorder %s102, %s118
      %p120 = scmp.eq.s32.totalorder %s21, 0
      %p121 = por %p119, %p120
      %s122 = ssub.s32 %s23, %s37
      %p123 = scmp.eq.s32.totalorder %s122, 0
      %s125 = sadd.s32 %s124, 1
      %s126 = scalar_select %p123, %s124, %s125
      %p129 = pneg %p123
      %p130 = scmp.eq.s32.totalorder %s15, 7
      %p131 = por %p129, %p130
      %p132 = scmp.ne.s32.totalorder %s124, %s127
      %p133 = scmp.eq.s32.totalorder %s15, 0
      %p134 = por %p132, %p133
      %p135 = scmp.ne.s32.totalorder %s124, %s127
      %p136 = scmp.eq.s32.totalorder %s20, 7
      %p137 = por %p135, %p136
      %p138 = scmp.ne.s32.totalorder %s127, %s128
      %p139 = scmp.eq.s32.totalorder %s20, 0
      %p140 = por %p138, %p139
      %p141 = scmp.ne.s32.totalorder %s127, %s128
      %p142 = scmp.eq.s32.totalorder %s21, 7
      %p143 = por %p141, %p142
      %p145 = scmp.ne.s32.totalorder %s128, %s144
      %p146 = scmp.eq.s32.totalorder %s21, 0
      %p147 = por %p145, %p146
      %s148 = ssub.s32 %s23, %s37
      %p149 = scmp.eq.s32.totalorder %s148, 0
      %s151 = sadd.s32 %s150, 1
      %s152 = scalar_select %p149, %s150, %s151
      %p155 = pneg %p149
      %p156 = scmp.eq.s32.totalorder %s15, 7
      %p157 = por %p155, %p156
      %p158 = scmp.ne.s32.totalorder %s150, %s153
      %p159 = scmp.eq.s32.totalorder %s15, 0
      %p160 = por %p158, %p159
      %p161 = scmp.ne.s32.totalorder %s150, %s153
      %p162 = scmp.eq.s32.totalorder %s20, 7
      %p163 = por %p161, %p162
      %p164 = scmp.ne.s32.totalorder %s153, %s154
      %p165 = scmp.eq.s32.totalorder %s20, 0
      %p166 = por %p164, %p165
      %p167 = scmp.ne.s32.totalorder %s153, %s154
      %p168 = scmp.eq.s32.totalorder %s21, 7
      %p169 = por %p167, %p168
      %p171 = scmp.ne.s32.totalorder %s154, %s170
      %p172 = scmp.eq.s32.totalorder %s21, 0
      %p173 = por %p171, %p172
      %s174 = ssub.s32 %s23, %s37
      %p175 = scmp.eq.s32.totalorder %s174, 0
      %s177 = sadd.s32 %s176, 1
      %s178 = scalar_select %p175, %s176, %s177
      %p181 = pneg %p175
      %p182 = scmp.eq.s32.totalorder %s15, 7
      %p183 = por %p181, %p182
      %p184 = scmp.ne.s32.totalorder %s176, %s179
      %p185 = scmp.eq.s32.totalorder %s15, 0
      %p186 = por %p184, %p185
      %p187 = scmp.ne.s32.totalorder %s176, %s179
      %p188 = scmp.eq.s32.totalorder %s20, 7
      %p189 = por %p187, %p188
      %p190 = scmp.ne.s32.totalorder %s179, %s180
      %p191 = scmp.eq.s32.totalorder %s20, 0
      %p192 = por %p190, %p191
      %p193 = scmp.ne.s32.totalorder %s179, %s180
      %p194 = scmp.eq.s32.totalorder %s21, 7
      %p195 = por %p193, %p194
      %p197 = scmp.ne.s32.totalorder %s180, %s196
      %p198 = scmp.eq.s32.totalorder %s21, 0
      %p199 = por %p197, %p198
      %s200 = ssub.s32 %s22, %s41
      %s201 = ssub.s32 %s23, %s37
      %s202 = sor.u32 %s200, %s201
      %s203 = ssub.s32 %s24, %s33
      %s204 = sor.u32 %s202, %s203
      %p205 = scmp.eq.s32.totalorder %s204, 0
      %s207 = sadd.s32 %s206, 1
      %s208 = scalar_select %p205, %s206, %s207
      %p211 = pneg %p205
      %p212 = scmp.eq.s32.totalorder %s15, 7
      %p213 = por %p211, %p212
      %p214 = scmp.ne.s32.totalorder %s206, %s209
      %p215 = scmp.eq.s32.totalorder %s15, 0
      %p216 = por %p214, %p215
      %p217 = scmp.ne.s32.totalorder %s206, %s209
      %p218 = scmp.eq.s32.totalorder %s20, 7
      %p219 = por %p217, %p218
      %p220 = scmp.ne.s32.totalorder %s209, %s210
      %p221 = scmp.eq.s32.totalorder %s20, 0
      %p222 = por %p220, %p221
      %p223 = scmp.ne.s32.totalorder %s209, %s210
      %p224 = scmp.eq.s32.totalorder %s21, 7
      %p225 = por %p223, %p224
      %p227 = scmp.ne.s32.totalorder %s210, %s226
      %p228 = scmp.eq.s32.totalorder %s21, 0
      %p229 = por %p227, %p228
      %p230 = scmp.le.s32.totalorder 1, %s15
      %p231 = scmp.lt.s32.totalorder %s15, 9
      %p232 = pnand %p230, %p231
      %p233 = pneg %p232
      // Predicated region
      $region9: #{context_self_attn.1} parent=5 // pred_check
        _
      $region10: #{context_self_attn.1} parent=5 // pred_check_branch
        %235 = sbr.rel (%p232) target = $region12
      $region11: #{context_self_attn.1} parent=5 // pred_region
        %s236 = ssub.s32 %s15, 1
      $region12: #{context_self_attn.1} parent=5 // pred_fallthru
        _
      %p237 = scmp.lt.s32.totalorder %s15, 8
      // Predicated region
      $region13: #{context_self_attn.1} parent=5 // pred_check
        %p238 = pneg %p237
      $region14: #{context_self_attn.1} parent=5 // pred_check_branch
        %240 = sbr.rel (%p238) target = $region16
      $region15: #{context_self_attn.1} parent=5 // pred_region
        // Predicated region
        $region17: #{context_self_attn.1} parent=15 // pred_check
          %p241 = pneg %p56
        $region18: #{context_self_attn.1} parent=15 // pred_check_branch
          %243 = sbr.rel (%p241) target = $region20
        $region19: #{context_self_attn.1} parent=15 // pred_region
          %p244 = scmp.lt.s32.totalorder %s22, 1
          %s245 = scalar_select %p244, %s22, 1
          %p246 = scmp.lt.s32.totalorder %s24, 0
          %s247 = scalar_select %p246, %s24, 0
          %s248 = sadd.s32 %s247, %s245
          %s249 = smul.addr %s248, 8
          %s250 = scalar_lea.vmem %s0, %s249
        $region20: #{context_self_attn.1} parent=15 // pred_fallthru
          _
        // Predicated region
        $region21: #{context_self_attn.1} parent=15 // pred_check
          %p251 = pneg %p82
        $region22: #{context_self_attn.1} parent=15 // pred_check_branch
          %253 = sbr.rel (%p251) target = $region24
        $region23: #{context_self_attn.1} parent=15 // pred_region
          %p254 = scmp.lt.s32.totalorder %s22, 1
          %s255 = scalar_select %p254, %s22, 1
          %s256 = smul.addr %s255, 8
          %s257 = scalar_lea.vmem %s1, %s256
        $region24: #{context_self_attn.1} parent=15 // pred_fallthru
          _
        // Predicated region
        $region25: #{context_self_attn.1} parent=15 // pred_check
          %p258 = pneg %p108
        $region26: #{context_self_attn.1} parent=15 // pred_check_branch
          %260 = sbr.rel (%p258) target = $region28
        $region27: #{context_self_attn.1} parent=15 // pred_region
          %p261 = scmp.lt.s32.totalorder %s23, 3
          %s262 = scalar_select %p261, %s23, 3
          %s263 = smul.addr %s262, 4
          %s264 = smul.addr %s263, 8
          %s265 = scalar_lea.vmem %s2, %s264
        $region28: #{context_self_attn.1} parent=15 // pred_fallthru
          _
        // Predicated region
        $region29: #{context_self_attn.1} parent=15 // pred_check
          %p266 = pneg %p134
        $region30: #{context_self_attn.1} parent=15 // pred_check_branch
          %268 = sbr.rel (%p266) target = $region32
        $region31: #{context_self_attn.1} parent=15 // pred_region
          %p269 = scmp.lt.s32.totalorder %s23, 3
          %s270 = scalar_select %p269, %s23, 3
          %s271 = smul.addr %s270, 4
          %s272 = smul.addr %s271, 8
          %s273 = scalar_lea.vmem %s3, %s272
        $region32: #{context_self_attn.1} parent=15 // pred_fallthru
          _
        // Predicated region
        $region33: #{context_self_attn.1} parent=15 // pred_check
          %p274 = pneg %p160
        $region34: #{context_self_attn.1} parent=15 // pred_check_branch
          %276 = sbr.rel (%p274) target = $region36
        $region35: #{context_self_attn.1} parent=15 // pred_region
          %p277 = scmp.lt.s32.totalorder %s23, 3
          %s278 = scalar_select %p277, %s23, 3
          %s279 = scalar_lea.vmem %s4, %s278
        $region36: #{context_self_attn.1} parent=15 // pred_fallthru
          _
        // Predicated region
        $region37: #{context_self_attn.1} parent=15 // pred_check
          %p280 = pneg %p186
        $region38: #{context_self_attn.1} parent=15 // pred_check_branch
          %282 = sbr.rel (%p280) target = $region40
        $region39: #{context_self_attn.1} parent=15 // pred_region
          %p283 = scmp.lt.s32.totalorder %s23, 3
          %s284 = scalar_select %p283, %s23, 3
          %s285 = scalar_lea.vmem %s5, %s284
        $region40: #{context_self_attn.1} parent=15 // pred_fallthru
          _
      $region16: #{context_self_attn.1} parent=5 // pred_fallthru
        _
      %p286 = scmp.le.s32.totalorder 1, %s15
      %p287 = scmp.lt.s32.totalorder %s15, 9
      %p288 = pnand %p286, %p287
      %p289 = pneg %p288
      // Predicated region
      $region41: #{context_self_attn.1} parent=5 // pred_check
        _
      $region42: #{context_self_attn.1} parent=5 // pred_check_branch
        %291 = sbr.rel (%p288) target = $region44
      $region43: #{context_self_attn.1} parent=5 // pred_region
        %s292 = ssub.s32 %s15, 1
        %p293 = scmp.lt.s32.totalorder %s25, 1
        %s294 = scalar_select %p293, %s25, 1
        %p295 = scmp.lt.s32.totalorder %s27, 0
        %s296 = scalar_select %p295, %s27, 0
        %s297 = sadd.s32 %s296, %s294
        %s298 = smul.addr %s297, 8
        %s299 = scalar_lea.vmem %s0, %s298
        %p300 = pneg %p62
        %p301 = pneg %p59
        %p302 = scmp.lt.s32.totalorder %s25, 1
        %s303 = scalar_select %p302, %s25, 1
        %s304 = smul.addr %s303, 8
        %s305 = scalar_lea.vmem %s1, %s304
        %p306 = pneg %p88
        %p307 = pneg %p85
        %p308 = scmp.lt.s32.totalorder %s26, 3
        %s309 = scalar_select %p308, %s26, 3
        %s310 = smul.addr %s309, 4
        %s311 = smul.addr %s310, 8
        %s312 = scalar_lea.vmem %s2, %s311
        %p313 = pneg %p114
        %p314 = pneg %p111
        %p315 = scmp.lt.s32.totalorder %s26, 3
        %s316 = scalar_select %p315, %s26, 3
        %s317 = smul.addr %s316, 4
        %s318 = smul.addr %s317, 8
        %s319 = scalar_lea.vmem %s3, %s318
        %p320 = pneg %p140
        %p321 = pneg %p137
        %p322 = scmp.lt.s32.totalorder %s26, 3
        %s323 = scalar_select %p322, %s26, 3
        %s324 = scalar_lea.vmem %s4, %s323
        %p325 = pneg %p166
        %p326 = pneg %p163
        %p327 = scmp.lt.s32.totalorder %s26, 3
        %s328 = scalar_select %p327, %s26, 3
        %s329 = scalar_lea.vmem %s5, %s328
        %p330 = pneg %p192
        %p331 = pneg %p189
        %p332 = pneg %p222
        %p333 = pneg %p219
        %s334 = sand.u32 %s209, 1
        %s335 = scalar_lea.sflag [#allocation4], %s334
        %s336 = sand.u32 %s209, 1
        %s337 = smul.addr %s336, 8
        %s338 = scalar_lea.vmem [#allocation3], %s337
        %p339 = scmp.lt.s32.totalorder %s25, 1
        %s340 = scalar_select %p339, %s25, 1
        %p341 = scmp.lt.s32.totalorder %s27, 0
        %s342 = scalar_select %p341, %s27, 0
        %s343 = sadd.s32 %s342, %s340
        %s344 = smul.addr %s343, 8
        %s345 = scalar_lea.vmem %s0, %s344
        %p346 = scmp.lt.s32.totalorder %s25, 1
        %s347 = scalar_select %p346, %s25, 1
        %s348 = smul.addr %s347, 8
        %s349 = scalar_lea.vmem %s1, %s348
        %p350 = scmp.lt.s32.totalorder %s26, 3
        %s351 = scalar_select %p350, %s26, 3
        %s352 = smul.addr %s351, 4
        %s353 = smul.addr %s352, 8
        %s354 = scalar_lea.vmem %s2, %s353
        %p355 = scmp.lt.s32.totalorder %s26, 3
        %s356 = scalar_select %p355, %s26, 3
        %s357 = smul.addr %s356, 4
        %s358 = smul.addr %s357, 8
        %s359 = scalar_lea.vmem %s3, %s358
        %p360 = scmp.lt.s32.totalorder %s26, 3
        %s361 = scalar_select %p360, %s26, 3
        %s362 = scalar_lea.vmem %s4, %s361
        %p363 = scmp.lt.s32.totalorder %s26, 3
        %s364 = scalar_select %p363, %s26, 3
        %s365 = scalar_lea.vmem %s5, %s364
        %p366 = scmp.eq.s32.totalorder %s27, 0
        // Predicated region
        $region45: #{context_self_attn.1} parent=43 // pred_check
          %p367 = pneg %p366
        $region46: #{context_self_attn.1} parent=43 // pred_check_branch
          %369 = sbr.rel (%p367) target = $region48
        $region47: #{context_self_attn.1} parent=43 // pred_region
          %v370 = vld [vmem:[%s349] sm:$0xff]
          %v371 = vld [vmem:[%s359] sm:$0xff]
          %v372 = vld [vmem:[%s359 + $0x8] sm:$0xff]
          %v373 = vld [vmem:[%s359 + $0x10] sm:$0xff]
          %v374 = vld [vmem:[%s359 + $0x18] sm:$0xff]
          %v375 = vld [vmem:[%s365] sm:$0x1]
          %v377 = vlaneseq
          %v378 = vshrl.u32 %v377, 7
          %v379 = vsub.s32 0, %v378
          %v380 = vrot.slane %v375, %v379
          %vm382 = vcmask 261120
          %v384 = vsel %vm382, %v370, 0
          %386 = vmatprep.subr.mxu0 0.0
          %387 = vmatpush1.msra.mxu0 %v371
          %388 = vmatprep.subr.mxu0 0.0
          %389 = vmatpush1.msra.mxu0 %v372
          %390 = vmatprep.subr.mxu0 0.0
          %391 = vmatpush1.msra.mxu0 %v373
          %392 = vmatprep.subr.mxu0 0.0
          %393 = vmatpush1.msra.mxu0 %v374
          %394 = vmatprep.subr.mxu0 0.0
          %395 = vmatpush1.msra.mxu0 0.0
          %396 = vmatprep.subr.mxu0 0.0
          %397 = vmatpush1.msra.mxu0 0.0
          %398 = vmatprep.subr.mxu0 0.0
          %399 = vmatpush1.msra.mxu0 0.0
          %400 = vmatprep.subr.mxu0 0.0
          %401 = vmatpush1.msra.mxu0 0.0
          %402 = vmatprep.subr.mxu0 0.0
          %403 = vmatpush1.msra.mxu0 0.0
          %404 = vmatprep.subr.mxu0 0.0
          %405 = vmatpush1.msra.mxu0 0.0
          %406 = vmatprep.subr.mxu0 0.0
          %407 = vmatpush1.msra.mxu0 0.0
          %408 = vmatprep.subr.mxu0 0.0
          %409 = vmatpush1.msra.mxu0 0.0
          %410 = vmatprep.subr.mxu0 0.0
          %411 = vmatpush1.msra.mxu0 0.0
          %412 = vmatprep.subr.mxu0 0.0
          %413 = vmatpush1.msra.mxu0 0.0
          %414 = vmatprep.subr.mxu0 0.0
          %415 = vmatpush1.msra.mxu0 0.0
          %416 = vmatprep.subr.mxu0 0.0
          %417 = vmatpush1.msra.mxu0 0.0
          %418 = vmatprep.subr.mxu0 0.0
          %419 = vmatpush1.msra.mxu0 0.0
          %420 = vmatprep.subr.mxu0 0.0
          %421 = vmatpush1.msra.mxu0 0.0
          %422 = vmatprep.subr.mxu0 0.0
          %423 = vmatpush1.msra.mxu0 0.0
          %424 = vmatprep.subr.mxu0 0.0
          %425 = vmatpush1.msra.mxu0 0.0
          %426 = vmatprep.subr.mxu0 0.0
          %427 = vmatpush1.msra.mxu0 0.0
          %428 = vmatprep.subr.mxu0 0.0
          %429 = vmatpush1.msra.mxu0 0.0
          %430 = vmatprep.subr.mxu0 0.0
          %431 = vmatpush1.msra.mxu0 0.0
          %432 = vmatprep.subr.mxu0 0.0
          %433 = vmatpush1.msra.mxu0 0.0
          %434 = vmatprep.subr.mxu0 0.0
          %435 = vmatpush1.msra.mxu0 0.0
          %436 = vmatprep.subr.mxu0 0.0
          %437 = vmatpush1.msra.mxu0 0.0
          %438 = vmatprep.subr.mxu0 0.0
          %439 = vmatpush1.msra.mxu0 0.0
          %440 = vmatprep.subr.mxu0 0.0
          %441 = vmatpush1.msra.mxu0 0.0
          %442 = vmatprep.subr.mxu0 0.0
          %443 = vmatpush1.msra.mxu0 0.0
          %444 = vmatprep.subr.mxu0 0.0
          %445 = vmatpush1.msra.mxu0 0.0
          %446 = vmatprep.subr.mxu0 0.0
          %447 = vmatpush1.msra.mxu0 0.0
          %448 = vmatprep.subr.mxu0 0.0
          %449 = vmatpush1.msra.mxu0 0.0
          %450 = vmatprep.mubr.f32.mxu0 0.0
          %451 = vmatmul.mubr.f32.gmra.mrb[0].mxu0 %v384
          %v452 = vpop.f32.mrb[0].mxu0
          %v453 = vadd.f32 %v380, %v452
          %v454 = vpop.f32.mrb[0].mxu0
          %455 = vdwg.mxu0
          %vm456 = vcmask 64512
          %457 = vst.msk [vmem:[#allocation2] sm:$0xff] %vm456, %v453
        $region48: #{context_self_attn.1} parent=43 // pred_fallthru
          _
        %v458 = vld [vmem:[%s345] sm:$0xff]
        %v459 = vld [vmem:[%s354] sm:$0xff]
        %v460 = vld [vmem:[%s354 + $0x8] sm:$0xff]
        %v461 = vld [vmem:[%s354 + $0x10] sm:$0xff]
        %v462 = vld [vmem:[%s354 + $0x18] sm:$0xff]
        %v463 = vld [vmem:[%s362] sm:$0x1]
        %v465 = vlaneseq
        %v466 = vshrl.u32 %v465, 7
        %v467 = vsub.s32 0, %v466
        %v468 = vrot.slane %v463, %v467
        %vm470 = vcmask 261120
        %v472 = vsel %vm470, %v458, 0
        %474 = vmatprep.subr.mxu0 0.0
        %475 = vmatpush1.msra.mxu0 %v459
        %476 = vmatprep.subr.mxu0 0.0
        %477 = vmatpush1.msra.mxu0 %v460
        %478 = vmatprep.subr.mxu0 0.0
        %479 = vmatpush1.msra.mxu0 %v461
        %480 = vmatprep.subr.mxu0 0.0
        %481 = vmatpush1.msra.mxu0 %v462
        %482 = vmatprep.subr.mxu0 0.0
        %483 = vmatpush1.msra.mxu0 0.0
        %484 = vmatprep.subr.mxu0 0.0
        %485 = vmatpush1.msra.mxu0 0.0
        %486 = vmatprep.subr.mxu0 0.0
        %487 = vmatpush1.msra.mxu0 0.0
        %488 = vmatprep.subr.mxu0 0.0
        %489 = vmatpush1.msra.mxu0 0.0
        %490 = vmatprep.subr.mxu0 0.0
        %491 = vmatpush1.msra.mxu0 0.0
        %492 = vmatprep.subr.mxu0 0.0
        %493 = vmatpush1.msra.mxu0 0.0
        %494 = vmatprep.subr.mxu0 0.0
        %495 = vmatpush1.msra.mxu0 0.0
        %496 = vmatprep.subr.mxu0 0.0
        %497 = vmatpush1.msra.mxu0 0.0
        %498 = vmatprep.subr.mxu0 0.0
        %499 = vmatpush1.msra.mxu0 0.0
        %500 = vmatprep.subr.mxu0 0.0
        %501 = vmatpush1.msra.mxu0 0.0
        %502 = vmatprep.subr.mxu0 0.0
        %503 = vmatpush1.msra.mxu0 0.0
        %504 = vmatprep.subr.mxu0 0.0
        %505 = vmatpush1.msra.mxu0 0.0
        %506 = vmatprep.subr.mxu0 0.0
        %507 = vmatpush1.msra.mxu0 0.0
        %508 = vmatprep.subr.mxu0 0.0
        %509 = vmatpush1.msra.mxu0 0.0
        %510 = vmatprep.subr.mxu0 0.0
        %511 = vmatpush1.msra.mxu0 0.0
        %512 = vmatprep.subr.mxu0 0.0
        %513 = vmatpush1.msra.mxu0 0.0
        %514 = vmatprep.subr.mxu0 0.0
        %515 = vmatpush1.msra.mxu0 0.0
        %516 = vmatprep.subr.mxu0 0.0
        %517 = vmatpush1.msra.mxu0 0.0
        %518 = vmatprep.subr.mxu0 0.0
        %519 = vmatpush1.msra.mxu0 0.0
        %520 = vmatprep.subr.mxu0 0.0
        %521 = vmatpush1.msra.mxu0 0.0
        %522 = vmatprep.subr.mxu0 0.0
        %523 = vmatpush1.msra.mxu0 0.0
        %524 = vmatprep.subr.mxu0 0.0
        %525 = vmatpush1.msra.mxu0 0.0
        %526 = vmatprep.subr.mxu0 0.0
        %527 = vmatpush1.msra.mxu0 0.0
        %528 = vmatprep.subr.mxu0 0.0
        %529 = vmatpush1.msra.mxu0 0.0
        %530 = vmatprep.subr.mxu0 0.0
        %531 = vmatpush1.msra.mxu0 0.0
        %532 = vmatprep.subr.mxu0 0.0
        %533 = vmatpush1.msra.mxu0 0.0
        %534 = vmatprep.subr.mxu0 0.0
        %535 = vmatpush1.msra.mxu0 0.0
        %536 = vmatprep.subr.mxu0 0.0
        %537 = vmatpush1.msra.mxu0 0.0
        %538 = vmatprep.mubr.f32.mxu0 0.0
        %539 = vmatmul.mubr.f32.gmra.mrb[0].mxu0 %v472
        %v540 = vpop.f32.mrb[0].mxu0
        %v541 = vadd.f32 %v468, %v540
        %v542 = vpop.f32.mrb[0].mxu0
        %543 = vdwg.mxu0
        %v544 = vld [vmem:[#allocation2] sm:$0xff]
        %vm545 = vcmask 64512
        %v547 = vsel %vm545, %v541, 0
        %v550 = vsel %vm545, %v544, 0
        %552 = vmatprep.subr.mxu0 0.0
        %553 = vmatpush1.xpose.msra.mxu0 %v550
        %554 = vmatprep.subr.mxu0 0.0
        %555 = vmatpush1.xpose.msra.mxu0 0.0
        %556 = vmatprep.subr.mxu0 0.0
        %557 = vmatpush1.xpose.msra.mxu0 0.0
        %558 = vmatprep.subr.mxu0 0.0
        %559 = vmatpush1.xpose.msra.mxu0 0.0
        %560 = vmatprep.subr.mxu0 0.0
        %561 = vmatpush1.xpose.msra.mxu0 0.0
        %562 = vmatprep.subr.mxu0 0.0
        %563 = vmatpush1.xpose.msra.mxu0 0.0
        %564 = vmatprep.subr.mxu0 0.0
        %565 = vmatpush1.xpose.msra.mxu0 0.0
        %566 = vmatprep.subr.mxu0 0.0
        %567 = vmatpush1.xpose.msra.mxu0 0.0
        %568 = vmatprep.subr.mxu0 0.0
        %569 = vmatpush1.xpose.msra.mxu0 0.0
        %570 = vmatprep.subr.mxu0 0.0
        %571 = vmatpush1.xpose.msra.mxu0 0.0
        %572 = vmatprep.subr.mxu0 0.0
        %573 = vmatpush1.xpose.msra.mxu0 0.0
        %574 = vmatprep.subr.mxu0 0.0
        %575 = vmatpush1.xpose.msra.mxu0 0.0
        %576 = vmatprep.subr.mxu0 0.0
        %577 = vmatpush1.xpose.msra.mxu0 0.0
        %578 = vmatprep.subr.mxu0 0.0
        %579 = vmatpush1.xpose.msra.mxu0 0.0
        %580 = vmatprep.subr.mxu0 0.0
        %581 = vmatpush1.xpose.msra.mxu0 0.0
        %582 = vmatprep.subr.mxu0 0.0
        %583 = vmatpush1.xpose.msra.mxu0 0.0
        %584 = vmatprep.subr.mxu0 0.0
        %585 = vmatpush1.xpose.msra.mxu0 0.0
        %586 = vmatprep.subr.mxu0 0.0
        %587 = vmatpush1.xpose.msra.mxu0 0.0
        %588 = vmatprep.subr.mxu0 0.0
        %589 = vmatpush1.xpose.msra.mxu0 0.0
        %590 = vmatprep.subr.mxu0 0.0
        %591 = vmatpush1.xpose.msra.mxu0 0.0
        %592 = vmatprep.subr.mxu0 0.0
        %593 = vmatpush1.xpose.msra.mxu0 0.0
        %594 = vmatprep.subr.mxu0 0.0
        %595 = vmatpush1.xpose.msra.mxu0 0.0
        %596 = vmatprep.subr.mxu0 0.0
        %597 = vmatpush1.xpose.msra.mxu0 0.0
        %598 = vmatprep.subr.mxu0 0.0
        %599 = vmatpush1.xpose.msra.mxu0 0.0
        %600 = vmatprep.subr.mxu0 0.0
        %601 = vmatpush1.xpose.msra.mxu0 0.0
        %602 = vmatprep.subr.mxu0 0.0
        %603 = vmatpush1.xpose.msra.mxu0 0.0
        %604 = vmatprep.subr.mxu0 0.0
        %605 = vmatpush1.xpose.msra.mxu0 0.0
        %606 = vmatprep.subr.mxu0 0.0
        %607 = vmatpush1.xpose.msra.mxu0 0.0
        %608 = vmatprep.subr.mxu0 0.0
        %609 = vmatpush1.xpose.msra.mxu0 0.0
        %610 = vmatprep.subr.mxu0 0.0
        %611 = vmatpush1.xpose.msra.mxu0 0.0
        %612 = vmatprep.subr.mxu0 0.0
        %613 = vmatpush1.xpose.msra.mxu0 0.0
        %614 = vmatprep.subr.mxu0 0.0
        %615 = vmatpush1.xpose.msra.mxu0 0.0
        %616 = vmatprep.mubr.f32.mxu0 0.0
        %617 = vmatmul.mubr.f32.gmra.mrb[0].mxu0 %v547
        %v618 = vpop.f32.mrb[0].mxu0
        %v619 = vadd.f32 0.0, %v618
        %v620 = vpop.f32.mrb[0].mxu0
        %621 = vdwg.mxu0
        %v622 = vmul.f32 %v619, 0.35355338
        %v623 = vlaneseq
        %v624 = vshrl.u32 %v623, 7
        %s625 = smul.u32 %s27, 8
        %v626 = vstv %s625
        %v627 = vadd.s32 %v624, %v626
        %v628 = vlaneseq
        %v629 = vand.u32 %v628, 127
        %vm630 = vcmp.gt.s32.totalorder %v629, %v627
        %v631 = vsub.f32 %v622, 10000.0
        %v632 = vsel %vm630, %v631, %v622
        %v633 = vsel %vm545, %v632, -inf
        %634 = vmax.xlane.f32.xlu0 %v633
        %v635 = vpop.xlane.xlu0 %634
        %v636 = vsub.f32 %v632, %v635
        %v637 = vmul.f32 %v636, 1.442695
        %v638 = vpow.pop %v637
        %v639 = vsel %vm545, %v638, 0.0
        %640 = vadd.xlane.f32.xlu0 %v639
        %v641 = vpop.xlane.xlu0 %640
        %v642 = vrcp.pop %v641
        %v643 = vmul.f32 %v638, %v642
        %644 = vst.msk [vmem:[%s338] sm:$0xff] %vm545, %v643
        %s645 = sand.u32 %s209, 1
        %s646 = scalar_lea.sflag [#allocation4], %s645
        %s647 = sand.u32 %s209, 1
        %s648 = smul.addr %s647, 8
        %s649 = scalar_lea.vmem [#allocation3], %s648
        // Predicated region
        $region49: #{context_self_attn.1} parent=43 // pred_check
          %p650 = pneg %p219
        $region50: #{context_self_attn.1} parent=43 // pred_check_branch
          %652 = sbr.rel (%p650) target = $region52
        $region51: #{context_self_attn.1} parent=43 // pred_region
          %s654 = ssub.s32 128, 128
          %655 = vsyncadd %s646, %s654
          %s656 = sadd.s32 %s27, %s26
          %s657 = smul.addr %s25, 4
          %s658 = sadd.s32 %s656, %s657
          %s659 = smul.addr %s658, 128
          %s660 = scalar_lea.hbm %s6, %s659
          %s662 = sshll.u32 %s649, 4
          %s663 = int_to_ptr.vmem [resolvable:$true] %s662
          %665 = dma.vmem_to_hbm [thread:$0]  %s663, 128, %s660, %s646
        $region52: #{context_self_attn.1} parent=43 // pred_fallthru
          _
      $region44: #{context_self_attn.1} parent=5 // pred_fallthru
        _
      %p666 = scmp.le.s32.totalorder 2, %s15
      // Predicated region
      $region53: #{context_self_attn.1} parent=5 // pred_check
        %p667 = pneg %p666
      $region54: #{context_self_attn.1} parent=5 // pred_check_branch
        %669 = sbr.rel (%p667) target = $region56
      $region55: #{context_self_attn.1} parent=5 // pred_region
        %s670 = ssub.s32 %s15, 2
        // Predicated region
        $region57: #{context_self_attn.1} parent=55 // pred_check
          %p671 = pneg %p225
        $region58: #{context_self_attn.1} parent=55 // pred_check_branch
          %673 = sbr.rel (%p671) target = $region60
        $region59: #{context_self_attn.1} parent=55 // pred_region
          %s674 = sand.u32 %s210, 1
          %s675 = scalar_lea.sflag [#allocation4], %s674
          %s676 = sand.u32 %s210, 1
          %s677 = smul.addr %s676, 8
          %s678 = scalar_lea.vmem [#allocation3], %s677
          %679 = dma.done %s675, 128
        $region60: #{context_self_attn.1} parent=55 // pred_fallthru
          _
      $region56: #{context_self_attn.1} parent=5 // pred_fallthru
        _
    $region6: #{context_self_attn.1} parent=1 // loop_footer
      %s19 = sadd.s32 1, %s15
    $region7: #{context_self_attn.1} parent=1 // loop_footer_branch
      %14 = sbr.rel target = $region3
    $region8: #{context_self_attn.1} parent=1 // loop_exit
      _
    %680 = vsyncpa [#allocation4], 1
    %s681 = scalar_lea.sflag [#allocation4], 1
    %682 = vsyncpa %s681, 1

</llo_original>
